<compile_context>
chip_gen: v5e
topology: v5e:2x2
jax: 0.10.0
libtpu: 0.0.40
codegen_flags: <defaults>
</compile_context>

<pallas_src>
import jax
import jax.numpy as jnp
from jax.experimental import pallas as pl
from jax.experimental.pallas import tpu as pltpu


def _round_up(x, m):
    return ((x + m - 1) // m) * m


def _tensorcores_per_chip():
    """Best-effort detection of multi-TensorCore chips (v7x). Defaults to 1."""
    try:
        kind = jax.devices()[0].device_kind.lower()
    except Exception:
        return 1
    return 2 if "v7" in kind else 1


def dqn_forward_kernel(x_ref, w1_ref, b1_ref, w2_ref, b2_ref, w3_ref, b3_ref,
                       act_ref):
    """One batch tile: fused 3-layer MLP + argmax over the action dim.

    x_ref:   (TB, obs_dim)   current batch tile (pipelined over the grid)
    w*_ref:  full weights/biases (VMEM-resident; index_map pins block 0)
    act_ref: (1, TB) int32   lane-dense action indices for this tile
    """
    x = x_ref[...]

    # layer 1: obs_dim -> hidden, ReLU. Cast LHS to the weight dtype so bf16
    # weights hit the MXU fast path; accumulate in f32.
    w1 = w1_ref[...]
    h1 = jnp.dot(x.astype(w1.dtype), w1,
                 preferred_element_type=jnp.float32) + b1_ref[...]
    h1 = jnp.maximum(h1, 0.0)

    # layer 2: hidden -> hidden, ReLU
    w2 = w2_ref[...]
    h2 = jnp.dot(h1.astype(w2.dtype), w2,
                 preferred_element_type=jnp.float32) + b2_ref[...]
    h2 = jnp.maximum(h2, 0.0)

    # layer 3: hidden -> n_actions (q-values), f32
    w3 = w3_ref[...]
    q = jnp.dot(h2.astype(w3.dtype), w3,
                preferred_element_type=jnp.float32) + b3_ref[...]

    # argmax over the action dim, emitted lane-dense (batch on the lane axis).
    # Transposing q (TB, A) -> (A, TB) is a tiny XLU op; the sublane reduce then
    # lands directly in the (1, TB) output layout (no masked partial stores).
    qt = q.T                                              # (A, TB)
    n_actions = qt.shape[0]
    row_idx = jax.lax.broadcasted_iota(jnp.int32, qt.shape, 0)
    q_max = jnp.max(qt, axis=0, keepdims=True)            # (1, TB)
    first = jnp.min(jnp.where(qt == q_max, row_idx, n_actions),
                    axis=0, keepdims=True)                # first occurrence on ties
    # all-NaN row guard: no element equals the max -> fall back to index 0
    # (stays in-range; see NaN note in the header).
    first = jnp.where(first >= n_actions, 0, first)
    act_ref[...] = first.astype(jnp.int32)


def _pad_params_for_lanes(w1, b1, w2, b2, w3, b3, *, hidden_multiple=256,
                          action_multiple=128, neg_bias=-1e30):
    """Pad hidden dim to a multiple of 256 and action dim to a multiple of 128.

    Padded hidden units are exact zeros (no effect after ReLU); padded action
    columns get a -1e30 bias so they can never win the argmax.
    """
    hidden = w1.shape[1]
    n_actions = w3.shape[1]
    hp = _round_up(hidden, hidden_multiple)
    ap = _round_up(n_actions, action_multiple)
    dh, da = hp - hidden, ap - n_actions
    w1 = jnp.pad(w1, ((0, 0), (0, dh)))
    b1 = jnp.pad(b1, ((0, 0), (0, dh)))
    w2 = jnp.pad(w2, ((0, dh), (0, dh)))
    b2 = jnp.pad(b2, ((0, 0), (0, dh)))
    w3 = jnp.pad(w3, ((0, dh), (0, da)))
    b3 = jnp.pad(b3, ((0, 0), (0, da)), constant_values=neg_bias)
    return w1, b1, w2, b2, w3, b3


def dqn_forward(obs, params, *, tb=1024, compute_dtype=jnp.bfloat16,
                pad_dims=False):
    """obs: (B, obs_dim) f32 (or bf16). params: dict of MLP weights. Returns (B,) int32.

    tb:            batch tile size (rounded to a multiple of 128; clamped only by
                   the padded batch and, on multi-TC chips, by a >=2-tile grid).
    compute_dtype: dtype for the matmul operands (default bf16, MXU-native);
                   accumulation and elementwise/argmax work stay f32.
    pad_dims:      pad hidden->multiple of 256 and actions->multiple of 128 so
                   MXU passes / lanes are dense (recommended for real configs
                   with odd dims on v6e/v7x).
    """
    w1, b1, w2, b2, w3, b3 = (params["w1"], params["b1"], params["w2"],
                              params["b2"], params["w3"], params["b3"])
    if pad_dims:
        w1, b1, w2, b2, w3, b3 = _pad_params_for_lanes(w1, b1, w2, b2, w3, b3)
    if compute_dtype is not None:
        w1 = w1.astype(compute_dtype)
        w2 = w2.astype(compute_dtype)
        w3 = w3.astype(compute_dtype)

    B, obs_dim = obs.shape
    hidden = w1.shape[1]
    n_actions = w3.shape[1]

    # --- batch tile selection ---------------------------------------------
    tb = max(128, _round_up(tb, 128))
    padded_min = _round_up(B, 128)
    tb = min(tb, padded_min)                   # don't over-pad tiny batches
    if _tensorcores_per_chip() >= 2 and padded_min >= 2 * 128:
        # keep >= 2 grid tiles so "parallel" can split across both TCs (v7x).
        tb = min(tb, max(128, (padded_min // 2) // 128 * 128))
    padded_b = _round_up(B, tb)
    if padded_b != B:
        obs = jnp.pad(obs, ((0, padded_b - B), (0, 0)))
    num_tiles = padded_b // tb

    # --- advisory cost + explicit VMEM budget -------------------------------
    flops = 2 * padded_b * (obs_dim * hidden + hidden * hidden + hidden * n_actions)
    weight_bytes = sum(a.size * a.dtype.itemsize for a in (w1, b1, w2, b2, w3, b3))
    bytes_accessed = int(obs.size * obs.dtype.itemsize + weight_bytes + padded_b * 4)

    obs_tile_bytes = tb * obs_dim * obs.dtype.itemsize
    act_bytes = tb * (2 * hidden + 2 * n_actions) * 4      # h1/h2/q/qt-ish f32
    vmem_budget = (2 * weight_bytes          # worst case (double-buffered weights)
                   + 2 * obs_tile_bytes      # double-buffered obs tile
                   + 2 * tb * 4              # double-buffered output tile
                   + act_bytes
                   + (4 << 20))              # headroom
    vmem_limit = int(min(max(vmem_budget, 16 << 20), 64 << 20))

    def _run(single_buffer_weights):
        def w_spec(a):
            # Grid-invariant weights/biases: same block every step -> VMEM-resident.
            if single_buffer_weights:
                return pl.BlockSpec(a.shape, lambda i: (0, 0),
                                    pipeline_mode=pl.Buffered(1))
            return pl.BlockSpec(a.shape, lambda i: (0, 0))

        in_specs = [
            # obs: one batch tile per grid step (pipelined / double-buffered).
            pl.BlockSpec((tb, obs_dim), lambda i: (i, 0)),
            w_spec(w1), w_spec(b1), w_spec(w2), w_spec(b2), w_spec(w3), w_spec(b3),
        ]
        return pl.pallas_call(
            dqn_forward_kernel,
            out_shape=jax.ShapeDtypeStruct((num_tiles, 1, tb), jnp.int32),
            grid=(num_tiles,),
            in_specs=in_specs,
            # lane-dense (1, TB) actions per tile; leading grid dim squeezed.
            out_specs=pl.BlockSpec((None, 1, tb), lambda i: (i, 0, 0)),
            compiler_params=pltpu.CompilerParams(
                dimension_semantics=("parallel",),
                vmem_limit_bytes=vmem_limit),
            cost_estimate=pl.CostEstimate(
                flops=flops, transcendentals=0, bytes_accessed=bytes_accessed),
        )(obs, w1, b1, w2, b2, w3, b3)

    try:
        out = _run(True)
    except Exception:
        # pipeline_mode=Buffered(1) not supported on this JAX build -> default buffering.
        out = _run(False)

    return out.reshape(padded_b)[:B]


def init_params(key, obs_dim, hidden, n_actions):
    """Deterministic synthetic parameters (shapes match a standard DQN MLP)."""
    k1, k2, k3 = jax.random.split(key, 3)
    scale = 0.1
    return {
        "w1": scale * jax.random.normal(k1, (obs_dim, hidden), jnp.float32),
        "b1": jnp.zeros((1, hidden), jnp.float32),
        "w2": scale * jax.random.normal(k2, (hidden, hidden), jnp.float32),
        "b2": jnp.zeros((1, hidden), jnp.float32),
        "w3": scale * jax.random.normal(k3, (hidden, n_actions), jnp.float32),
        "b3": jnp.zeros((1, n_actions), jnp.float32),
    }


def dqn_forward_ref(obs, params, compute_dtype=jnp.bfloat16):
    """Pure-JAX reference matching the kernel's precision (bf16 operands, f32 acc)."""
    cd = compute_dtype if compute_dtype is not None else obs.dtype
    w1 = params["w1"].astype(cd)
    w2 = params["w2"].astype(cd)
    w3 = params["w3"].astype(cd)
    h1 = jnp.maximum(jnp.dot(obs.astype(cd), w1,
                             preferred_element_type=jnp.float32) + params["b1"], 0.0)
    h2 = jnp.maximum(jnp.dot(h1.astype(cd), w2,
                             preferred_element_type=jnp.float32) + params["b2"], 0.0)
    q = jnp.dot(h2.astype(cd), w3,
                preferred_element_type=jnp.float32) + params["b3"]
    return jnp.argmax(q, axis=1).astype(jnp.int32)


if __name__ == "__main__":
    B, OBS_DIM, HIDDEN, N_ACTIONS = 8, 32, 32, 8

    key = jax.random.PRNGKey(0)
    k_obs, k_params = jax.random.split(key)
    obs = jax.random.normal(k_obs, (B, OBS_DIM), jnp.float32)
    params = init_params(k_params, OBS_DIM, HIDDEN, N_ACTIONS)

    # Default path: bf16 matmul operands, f32 accumulation, lane-dense output.
    actions = jax.block_until_ready(dqn_forward(obs, params))
    expected = jax.block_until_ready(dqn_forward_ref(obs, params))
    assert actions.shape == (B,) and actions.dtype == jnp.int32
    assert bool(jnp.all(actions == expected)), (actions, expected)

    # Lane/MXU-padded path (v6e/v7x dim padding): must give identical actions.
    actions_padded = jax.block_until_ready(dqn_forward(obs, params, pad_dims=True))
    assert bool(jnp.all(actions_padded == expected)), (actions_padded, expected)

    print("KERNEL_OK")
</pallas_src>

<mosaic_0001>
module attributes {stable_mosaic.version = 11 : i64} {
  func.func @dqn_forward_kernel(%arg0: i32, %arg1: memref<128x32xf32, #tpu.memory_space<vmem>>, %arg2: memref<32x32xbf16, #tpu.memory_space<vmem>>, %arg3: memref<1x32xf32, #tpu.memory_space<vmem>>, %arg4: memref<32x32xbf16, #tpu.memory_space<vmem>>, %arg5: memref<1x32xf32, #tpu.memory_space<vmem>>, %arg6: memref<32x8xbf16, #tpu.memory_space<vmem>>, %arg7: memref<1x8xf32, #tpu.memory_space<vmem>>, %arg8: memref<1x1x128xi32, #tpu.memory_space<vmem>>) attributes {dimension_semantics = [#tpu.dimension_semantics<parallel>], iteration_bounds = array<i64: 1>, scalar_prefetch = 0 : i64, scratch_operands = 0 : i64, tpu.core_type = #tpu.core_type<tc>, window_params = [{transform_indices = @transform_0, window_bounds = array<i64: 128, 32>}, {pipeline_mode = #tpu.pipeline_mode<synchronous>, transform_indices = @transform_1, window_bounds = array<i64: 32, 32>}, {pipeline_mode = #tpu.pipeline_mode<synchronous>, transform_indices = @transform_2, window_bounds = array<i64: 1, 32>}, {pipeline_mode = #tpu.pipeline_mode<synchronous>, transform_indices = @transform_3, window_bounds = array<i64: 32, 32>}, {pipeline_mode = #tpu.pipeline_mode<synchronous>, transform_indices = @transform_4, window_bounds = array<i64: 1, 32>}, {pipeline_mode = #tpu.pipeline_mode<synchronous>, transform_indices = @transform_5, window_bounds = array<i64: 32, 8>}, {pipeline_mode = #tpu.pipeline_mode<synchronous>, transform_indices = @transform_6, window_bounds = array<i64: 1, 8>}, {transform_indices = @transform_7, window_bounds = array<i64: 1, 1, 128>}]} {
    %c0 = arith.constant 0 : index
    %c0_0 = arith.constant 0 : index
    %0 = vector.load %arg1[%c0, %c0_0] : memref<128x32xf32, #tpu.memory_space<vmem>>, vector<128x32xf32>
    %c0_1 = arith.constant 0 : index
    %c0_2 = arith.constant 0 : index
    %1 = vector.load %arg2[%c0_1, %c0_2] : memref<32x32xbf16, #tpu.memory_space<vmem>>, vector<32x32xbf16>
    %2 = arith.truncf %0 : vector<128x32xf32> to vector<128x32xbf16>
    %cst = arith.constant dense<0.000000e+00> : vector<128x32xf32>
    %3 = tpu.matmul %2, %1, %cst {dimension_numbers = #tpu.dot_dimension_numbers<[1], [0], [0], [1], [0, 0, 1, 1], [], []>} : vector<128x32xbf16>, vector<32x32xbf16>, vector<128x32xf32> -> vector<128x32xf32>
    %c0_3 = arith.constant 0 : index
    %c0_4 = arith.constant 0 : index
    %4 = vector.load %arg3[%c0_3, %c0_4] : memref<1x32xf32, #tpu.memory_space<vmem>>, vector<1x32xf32>
    %5 = vector.broadcast %4 : vector<1x32xf32> to vector<128x32xf32>
    %6 = arith.addf %3, %5 : vector<128x32xf32>
    %cst_5 = arith.constant 0.000000e+00 : f32
    %7 = vector.broadcast %cst_5 : f32 to vector<128x32xf32>
    %8 = arith.maximumf %6, %7 : vector<128x32xf32>
    %c0_6 = arith.constant 0 : index
    %c0_7 = arith.constant 0 : index
    %9 = vector.load %arg4[%c0_6, %c0_7] : memref<32x32xbf16, #tpu.memory_space<vmem>>, vector<32x32xbf16>
    %10 = arith.truncf %8 : vector<128x32xf32> to vector<128x32xbf16>
    %cst_8 = arith.constant dense<0.000000e+00> : vector<128x32xf32>
    %11 = tpu.matmul %10, %9, %cst_8 {dimension_numbers = #tpu.dot_dimension_numbers<[1], [0], [0], [1], [0, 0, 1, 1], [], []>} : vector<128x32xbf16>, vector<32x32xbf16>, vector<128x32xf32> -> vector<128x32xf32>
    %c0_9 = arith.constant 0 : index
    %c0_10 = arith.constant 0 : index
    %12 = vector.load %arg5[%c0_9, %c0_10] : memref<1x32xf32, #tpu.memory_space<vmem>>, vector<1x32xf32>
    %13 = vector.broadcast %12 : vector<1x32xf32> to vector<128x32xf32>
    %14 = arith.addf %11, %13 : vector<128x32xf32>
    %cst_11 = arith.constant 0.000000e+00 : f32
    %15 = vector.broadcast %cst_11 : f32 to vector<128x32xf32>
    %16 = arith.maximumf %14, %15 : vector<128x32xf32>
    %c0_12 = arith.constant 0 : index
    %c0_13 = arith.constant 0 : index
    %17 = vector.load %arg6[%c0_12, %c0_13] : memref<32x8xbf16, #tpu.memory_space<vmem>>, vector<32x8xbf16>
    %18 = arith.truncf %16 : vector<128x32xf32> to vector<128x32xbf16>
    %cst_14 = arith.constant dense<0.000000e+00> : vector<128x8xf32>
    %19 = tpu.matmul %18, %17, %cst_14 {dimension_numbers = #tpu.dot_dimension_numbers<[1], [0], [0], [1], [0, 0, 1, 1], [], []>} : vector<128x32xbf16>, vector<32x8xbf16>, vector<128x8xf32> -> vector<128x8xf32>
    %c0_15 = arith.constant 0 : index
    %c0_16 = arith.constant 0 : index
    %20 = vector.load %arg7[%c0_15, %c0_16] : memref<1x8xf32, #tpu.memory_space<vmem>>, vector<1x8xf32>
    %21 = vector.broadcast %20 : vector<1x8xf32> to vector<128x8xf32>
    %22 = arith.addf %19, %21 : vector<128x8xf32>
    %23 = tpu.transpose %22, [1, 0] : vector<128x8xf32> -> vector<8x128xf32>
    %24 = tpu.iota {dimensions = array<i32: 0>} : vector<8x128xi32>
    %cst_17 = arith.constant dense<0xFF800000> : vector<128xf32>
    %25 = vector.multi_reduction <maximumf>, %23, %cst_17 [0] : vector<8x128xf32> to vector<128xf32>
    %26 = vector.shape_cast %25 : vector<128xf32> to vector<1x128xf32>
    %27 = vector.broadcast %26 : vector<1x128xf32> to vector<8x128xf32>
    %28 = arith.cmpf oeq, %23, %27 : vector<8x128xf32>
    %c8_i32 = arith.constant 8 : i32
    %29 = vector.broadcast %c8_i32 : i32 to vector<8x128xi32>
    %30 = arith.select %28, %24, %29 : vector<8x128xi1>, vector<8x128xi32>
    %cst_18 = arith.constant dense<2147483647> : vector<128xi32>
    %31 = vector.multi_reduction <minsi>, %30, %cst_18 [0] : vector<8x128xi32> to vector<128xi32>
    %32 = vector.shape_cast %31 : vector<128xi32> to vector<1x128xi32>
    %c8_i32_19 = arith.constant 8 : i32
    %33 = vector.broadcast %c8_i32_19 : i32 to vector<1x128xi32>
    %34 = arith.cmpi sge, %32, %33 : vector<1x128xi32>
    %c0_i32 = arith.constant 0 : i32
    %35 = vector.broadcast %c0_i32 : i32 to vector<1x128xi32>
    %36 = arith.select %34, %35, %32 : vector<1x128xi1>, vector<1x128xi32>
    %c0_20 = arith.constant 0 : index
    %c0_21 = arith.constant 0 : index
    %c0_22 = arith.constant 0 : index
    %37 = vector.load %arg8[%c0_20, %c0_21, %c0_22] : memref<1x1x128xi32, #tpu.memory_space<vmem>>, vector<1x1x128xi32>
    %38 = vector.shape_cast %37 : vector<1x1x128xi32> to vector<1x128xi32>
    %39 = vector.shape_cast %36 : vector<1x128xi32> to vector<1x1x128xi32>
    tpu.vector_store %arg8[%c0_20, %c0_21, %c0_22], %39 {strides = array<i32>} : memref<1x1x128xi32, #tpu.memory_space<vmem>>, vector<1x1x128xi32>,
    return
  }
  func.func @transform_0(%arg0: i32) -> (i32, i32) {
    %c0_i32 = arith.constant 0 : i32
    %c0_i32_0 = arith.constant 0 : i32
    return %arg0, %c0_i32 : i32, i32
  }
  func.func @transform_1(%arg0: i32) -> (i32, i32) {
    %c0_i32 = arith.constant 0 : i32
    %c0_i32_0 = arith.constant 0 : i32
    %c0_i32_1 = arith.constant 0 : i32
    return %c0_i32, %c0_i32_0 : i32, i32
  }
  func.func @transform_2(%arg0: i32) -> (i32, i32) {
    %c0_i32 = arith.constant 0 : i32
    %c0_i32_0 = arith.constant 0 : i32
    %c0_i32_1 = arith.constant 0 : i32
    return %c0_i32, %c0_i32_0 : i32, i32
  }
  func.func @transform_3(%arg0: i32) -> (i32, i32) {
    %c0_i32 = arith.constant 0 : i32
    %c0_i32_0 = arith.constant 0 : i32
    %c0_i32_1 = arith.constant 0 : i32
    return %c0_i32, %c0_i32_0 : i32, i32
  }
  func.func @transform_4(%arg0: i32) -> (i32, i32) {
    %c0_i32 = arith.constant 0 : i32
    %c0_i32_0 = arith.constant 0 : i32
    %c0_i32_1 = arith.constant 0 : i32
    return %c0_i32, %c0_i32_0 : i32, i32
  }
  func.func @transform_5(%arg0: i32) -> (i32, i32) {
    %c0_i32 = arith.constant 0 : i32
    %c0_i32_0 = arith.constant 0 : i32
    %c0_i32_1 = arith.constant 0 : i32
    return %c0_i32, %c0_i32_0 : i32, i32
  }
  func.func @transform_6(%arg0: i32) -> (i32, i32) {
    %c0_i32 = arith.constant 0 : i32
    %c0_i32_0 = arith.constant 0 : i32
    %c0_i32_1 = arith.constant 0 : i32
    return %c0_i32, %c0_i32_0 : i32, i32
  }
  func.func @transform_7(%arg0: i32) -> (i32, i32, i32) {
    %c0_i32 = arith.constant 0 : i32
    %c0_i32_0 = arith.constant 0 : i32
    %c0_i32_1 = arith.constant 0 : i32
    return %arg0, %c0_i32, %c0_i32_0 : i32, i32, i32
  }
}

module attributes {stable_mosaic.version = 11 : i64} {
  func.func @dqn_forward_kernel(%arg0: i32, %arg1: memref<128x32xf32, #tpu.memory_space<vmem>>, %arg2: memref<32x32xbf16, #tpu.memory_space<vmem>>, %arg3: memref<1x32xf32, #tpu.memory_space<vmem>>, %arg4: memref<32x32xbf16, #tpu.memory_space<vmem>>, %arg5: memref<1x32xf32, #tpu.memory_space<vmem>>, %arg6: memref<32x8xbf16, #tpu.memory_space<vmem>>, %arg7: memref<1x8xf32, #tpu.memory_space<vmem>>, %arg8: memref<1x1x128xi32, #tpu.memory_space<vmem>>) attributes {dimension_semantics = [#tpu.dimension_semantics<parallel>], iteration_bounds = array<i64: 1>, scalar_prefetch = 0 : i64, scratch_operands = 0 : i64, tpu.core_type = #tpu.core_type<tc>, window_params = [{transform_indices = @transform_0, window_bounds = array<i64: 128, 32>}, {pipeline_mode = #tpu.pipeline_mode<synchronous>, transform_indices = @transform_1, window_bounds = array<i64: 32, 32>}, {pipeline_mode = #tpu.pipeline_mode<synchronous>, transform_indices = @transform_2, window_bounds = array<i64: 1, 32>}, {pipeline_mode = #tpu.pipeline_mode<synchronous>, transform_indices = @transform_3, window_bounds = array<i64: 32, 32>}, {pipeline_mode = #tpu.pipeline_mode<synchronous>, transform_indices = @transform_4, window_bounds = array<i64: 1, 32>}, {pipeline_mode = #tpu.pipeline_mode<synchronous>, transform_indices = @transform_5, window_bounds = array<i64: 32, 8>}, {pipeline_mode = #tpu.pipeline_mode<synchronous>, transform_indices = @transform_6, window_bounds = array<i64: 1, 8>}, {transform_indices = @transform_7, window_bounds = array<i64: 1, 1, 128>}]} {
    %c0 = arith.constant 0 : index
    %c0_0 = arith.constant 0 : index
    %0 = vector.load %arg1[%c0, %c0_0] : memref<128x32xf32, #tpu.memory_space<vmem>>, vector<128x32xf32>
    %c0_1 = arith.constant 0 : index
    %c0_2 = arith.constant 0 : index
    %1 = vector.load %arg2[%c0_1, %c0_2] : memref<32x32xbf16, #tpu.memory_space<vmem>>, vector<32x32xbf16>
    %2 = arith.truncf %0 : vector<128x32xf32> to vector<128x32xbf16>
    %cst = arith.constant dense<0.000000e+00> : vector<128x32xf32>
    %3 = tpu.matmul %2, %1, %cst {dimension_numbers = #tpu.dot_dimension_numbers<[1], [0], [0], [1], [0, 0, 1, 1], [], []>} : vector<128x32xbf16>, vector<32x32xbf16>, vector<128x32xf32> -> vector<128x32xf32>
    %c0_3 = arith.constant 0 : index
    %c0_4 = arith.constant 0 : index
    %4 = vector.load %arg3[%c0_3, %c0_4] : memref<1x32xf32, #tpu.memory_space<vmem>>, vector<1x32xf32>
    %5 = vector.broadcast %4 : vector<1x32xf32> to vector<128x32xf32>
    %6 = arith.addf %3, %5 : vector<128x32xf32>
    %cst_5 = arith.constant 0.000000e+00 : f32
    %7 = vector.broadcast %cst_5 : f32 to vector<128x32xf32>
    %8 = arith.maximumf %6, %7 : vector<128x32xf32>
    %c0_6 = arith.constant 0 : index
    %c0_7 = arith.constant 0 : index
    %9 = vector.load %arg4[%c0_6, %c0_7] : memref<32x32xbf16, #tpu.memory_space<vmem>>, vector<32x32xbf16>
    %10 = arith.truncf %8 : vector<128x32xf32> to vector<128x32xbf16>
    %cst_8 = arith.constant dense<0.000000e+00> : vector<128x32xf32>
    %11 = tpu.matmul %10, %9, %cst_8 {dimension_numbers = #tpu.dot_dimension_numbers<[1], [0], [0], [1], [0, 0, 1, 1], [], []>} : vector<128x32xbf16>, vector<32x32xbf16>, vector<128x32xf32> -> vector<128x32xf32>
    %c0_9 = arith.constant 0 : index
    %c0_10 = arith.constant 0 : index
    %12 = vector.load %arg5[%c0_9, %c0_10] : memref<1x32xf32, #tpu.memory_space<vmem>>, vector<1x32xf32>
    %13 = vector.broadcast %12 : vector<1x32xf32> to vector<128x32xf32>
    %14 = arith.addf %11, %13 : vector<128x32xf32>
    %cst_11 = arith.constant 0.000000e+00 : f32
    %15 = vector.broadcast %cst_11 : f32 to vector<128x32xf32>
    %16 = arith.maximumf %14, %15 : vector<128x32xf32>
    %c0_12 = arith.constant 0 : index
    %c0_13 = arith.constant 0 : index
    %17 = vector.load %arg6[%c0_12, %c0_13] : memref<32x8xbf16, #tpu.memory_space<vmem>>, vector<32x8xbf16>
    %18 = arith.truncf %16 : vector<128x32xf32> to vector<128x32xbf16>
    %cst_14 = arith.constant dense<0.000000e+00> : vector<128x8xf32>
    %19 = tpu.matmul %18, %17, %cst_14 {dimension_numbers = #tpu.dot_dimension_numbers<[1], [0], [0], [1], [0, 0, 1, 1], [], []>} : vector<128x32xbf16>, vector<32x8xbf16>, vector<128x8xf32> -> vector<128x8xf32>
    %c0_15 = arith.constant 0 : index
    %c0_16 = arith.constant 0 : index
    %20 = vector.load %arg7[%c0_15, %c0_16] : memref<1x8xf32, #tpu.memory_space<vmem>>, vector<1x8xf32>
    %21 = vector.broadcast %20 : vector<1x8xf32> to vector<128x8xf32>
    %22 = arith.addf %19, %21 : vector<128x8xf32>
    %23 = tpu.transpose %22, [1, 0] : vector<128x8xf32> -> vector<8x128xf32>
    %24 = tpu.iota {dimensions = array<i32: 0>} : vector<8x128xi32>
    %cst_17 = arith.constant dense<0xFF800000> : vector<128xf32>
    %25 = vector.multi_reduction <maximumf>, %23, %cst_17 [0] : vector<8x128xf32> to vector<128xf32>
    %26 = vector.shape_cast %25 : vector<128xf32> to vector<1x128xf32>
    %27 = vector.broadcast %26 : vector<1x128xf32> to vector<8x128xf32>
    %28 = arith.cmpf oeq, %23, %27 : vector<8x128xf32>
    %c8_i32 = arith.constant 8 : i32
    %29 = vector.broadcast %c8_i32 : i32 to vector<8x128xi32>
    %30 = arith.select %28, %24, %29 : vector<8x128xi1>, vector<8x128xi32>
    %cst_18 = arith.constant dense<2147483647> : vector<128xi32>
    %31 = vector.multi_reduction <minsi>, %30, %cst_18 [0] : vector<8x128xi32> to vector<128xi32>
    %32 = vector.shape_cast %31 : vector<128xi32> to vector<1x128xi32>
    %c8_i32_19 = arith.constant 8 : i32
    %33 = vector.broadcast %c8_i32_19 : i32 to vector<1x128xi32>
    %34 = arith.cmpi sge, %32, %33 : vector<1x128xi32>
    %c0_i32 = arith.constant 0 : i32
    %35 = vector.broadcast %c0_i32 : i32 to vector<1x128xi32>
    %36 = arith.select %34, %35, %32 : vector<1x128xi1>, vector<1x128xi32>
    %c0_20 = arith.constant 0 : index
    %c0_21 = arith.constant 0 : index
    %c0_22 = arith.constant 0 : index
    %37 = vector.load %arg8[%c0_20, %c0_21, %c0_22] : memref<1x1x128xi32, #tpu.memory_space<vmem>>, vector<1x1x128xi32>
    %38 = vector.shape_cast %37 : vector<1x1x128xi32> to vector<1x128xi32>
    %39 = vector.shape_cast %36 : vector<1x128xi32> to vector<1x1x128xi32>
    tpu.vector_store %arg8[%c0_20, %c0_21, %c0_22], %39 {strides = array<i32>} : memref<1x1x128xi32, #tpu.memory_space<vmem>>, vector<1x1x128xi32>,
    return
  }
  func.func @transform_0(%arg0: i32) -> (i32, i32) {
    %c0_i32 = arith.constant 0 : i32
    %c0_i32_0 = arith.constant 0 : i32
    return %arg0, %c0_i32 : i32, i32
  }
  func.func @transform_1(%arg0: i32) -> (i32, i32) {
    %c0_i32 = arith.constant 0 : i32
    %c0_i32_0 = arith.constant 0 : i32
    %c0_i32_1 = arith.constant 0 : i32
    return %c0_i32, %c0_i32_0 : i32, i32
  }
  func.func @transform_2(%arg0: i32) -> (i32, i32) {
    %c0_i32 = arith.constant 0 : i32
    %c0_i32_0 = arith.constant 0 : i32
    %c0_i32_1 = arith.constant 0 : i32
    return %c0_i32, %c0_i32_0 : i32, i32
  }
  func.func @transform_3(%arg0: i32) -> (i32, i32) {
    %c0_i32 = arith.constant 0 : i32
    %c0_i32_0 = arith.constant 0 : i32
    %c0_i32_1 = arith.constant 0 : i32
    return %c0_i32, %c0_i32_0 : i32, i32
  }
  func.func @transform_4(%arg0: i32) -> (i32, i32) {
    %c0_i32 = arith.constant 0 : i32
    %c0_i32_0 = arith.constant 0 : i32
    %c0_i32_1 = arith.constant 0 : i32
    return %c0_i32, %c0_i32_0 : i32, i32
  }
  func.func @transform_5(%arg0: i32) -> (i32, i32) {
    %c0_i32 = arith.constant 0 : i32
    %c0_i32_0 = arith.constant 0 : i32
    %c0_i32_1 = arith.constant 0 : i32
    return %c0_i32, %c0_i32_0 : i32, i32
  }
  func.func @transform_6(%arg0: i32) -> (i32, i32) {
    %c0_i32 = arith.constant 0 : i32
    %c0_i32_0 = arith.constant 0 : i32
    %c0_i32_1 = arith.constant 0 : i32
    return %c0_i32, %c0_i32_0 : i32, i32
  }
  func.func @transform_7(%arg0: i32) -> (i32, i32, i32) {
    %c0_i32 = arith.constant 0 : i32
    %c0_i32_0 = arith.constant 0 : i32
    %c0_i32_1 = arith.constant 0 : i32
    return %arg0, %c0_i32, %c0_i32_0 : i32, i32, i32
  }
}

</mosaic_0001>

<llo_original>
// kernel: tpu_custom_call.1
$region0: #{tpu_custom_call.1}
  #allocation0 [shape = 'u32[]', space=smem, size = 0x4, offset = 0x4, fixed_abs, tag = 'smem constant byte address 0x4 - core index']
  #allocation1 [shape = 'u32[72,128]{1,0:T(1,128)}', space=vmem, size = 0x9000, scoped, tag = 'internal scratch']
  %s0 = inlined_call_operand.vmem [shape: f32[128,32], index: 0, kind: input, shape index: {}]
  %s1 = inlined_call_operand.vmem [shape: bf16[32,32], index: 1, kind: input, shape index: {}]
  %s2 = inlined_call_operand.vmem [shape: f32[1,32], index: 2, kind: input, shape index: {}]
  %s3 = inlined_call_operand.vmem [shape: bf16[32,32], index: 3, kind: input, shape index: {}]
  %s4 = inlined_call_operand.vmem [shape: f32[1,32], index: 4, kind: input, shape index: {}]
  %s5 = inlined_call_operand.vmem [shape: bf16[32,8], index: 5, kind: input, shape index: {}]
  %s6 = inlined_call_operand.vmem [shape: f32[1,8], index: 6, kind: input, shape index: {}]
  %s7 = inlined_call_operand.hbm [shape: s32[1,1,128], index: 7, kind: output, shape index: {}]
  %s8 = sld [smem:[#allocation0]]
  $region38: #{tpu_custom_call.1} parent=0
    _
  %s10 = ssub.s32 1, %s8
  %s11 = scalar_select 0, %s10, %s8
  $region1: #{tpu_custom_call.1} parent=0
    #allocation2 [shape = 'u8[512]{0}', space=vmem, size = 0x400, scoped, tag = 'output window, operand 0, single buffered']
    #allocation3 [shape = 's32[1]{0}', space=sflag, size = 0x4, scoped, tag = 'scoped memory for tpu_custom_call.1']
    %12 = vsyncpa [#allocation3], 0
    // Predicated region
    $region2: #{tpu_custom_call.1} parent=1 // pred_check
      _
    $region3: #{tpu_custom_call.1} parent=1 // pred_check_branch
      %14 = sbr.rel (0) target = $region5
    $region4: #{tpu_custom_call.1} parent=1 // pred_region
      _
    $region5: #{tpu_custom_call.1} parent=1 // pred_fallthru
      _
    // Predicated region
    $region6: #{tpu_custom_call.1} parent=1 // pred_check
      _
    $region7: #{tpu_custom_call.1} parent=1 // pred_check_branch
      %16 = sbr.rel (0) target = $region9
    $region8: #{tpu_custom_call.1} parent=1 // pred_region
      _
    $region9: #{tpu_custom_call.1} parent=1 // pred_fallthru
      _
    // Predicated region
    $region10: #{tpu_custom_call.1} parent=1 // pred_check
      _
    $region11: #{tpu_custom_call.1} parent=1 // pred_check_branch
      %18 = sbr.rel (0) target = $region13
    $region12: #{tpu_custom_call.1} parent=1 // pred_region
      _
    $region13: #{tpu_custom_call.1} parent=1 // pred_fallthru
      _
    // Predicated region
    $region14: #{tpu_custom_call.1} parent=1 // pred_check
      _
    $region15: #{tpu_custom_call.1} parent=1 // pred_check_branch
      %20 = sbr.rel (0) target = $region17
    $region16: #{tpu_custom_call.1} parent=1 // pred_region
      _
    $region17: #{tpu_custom_call.1} parent=1 // pred_fallthru
      _
    // Predicated region
    $region18: #{tpu_custom_call.1} parent=1 // pred_check
      _
    $region19: #{tpu_custom_call.1} parent=1 // pred_check_branch
      %22 = sbr.rel (0) target = $region21
    $region20: #{tpu_custom_call.1} parent=1 // pred_region
      _
    $region21: #{tpu_custom_call.1} parent=1 // pred_fallthru
      _
    // Predicated region
    $region22: #{tpu_custom_call.1} parent=1 // pred_check
      _
    $region23: #{tpu_custom_call.1} parent=1 // pred_check_branch
      %24 = sbr.rel (0) target = $region25
    $region24: #{tpu_custom_call.1} parent=1 // pred_region
      _
    $region25: #{tpu_custom_call.1} parent=1 // pred_fallthru
      _
    // Predicated region
    $region26: #{tpu_custom_call.1} parent=1 // pred_check
      _
    $region27: #{tpu_custom_call.1} parent=1 // pred_check_branch
      %26 = sbr.rel (0) target = $region29
    $region28: #{tpu_custom_call.1} parent=1 // pred_region
      _
    $region29: #{tpu_custom_call.1} parent=1 // pred_fallthru
      _
    %v28 = vld [vmem:[%s0] sm:$0xff]
    %v29 = vld [vmem:[%s0 + $0x8] sm:$0xff]
    %v30 = vld [vmem:[%s0 + $0x10] sm:$0xff]
    %v31 = vld [vmem:[%s0 + $0x18] sm:$0xff]
    %v32 = vld [vmem:[%s0 + $0x20] sm:$0xff]
    %v33 = vld [vmem:[%s0 + $0x28] sm:$0xff]
    %v34 = vld [vmem:[%s0 + $0x30] sm:$0xff]
    %v35 = vld [vmem:[%s0 + $0x38] sm:$0xff]
    %v36 = vld [vmem:[%s0 + $0x40] sm:$0xff]
    %v37 = vld [vmem:[%s0 + $0x48] sm:$0xff]
    %v38 = vld [vmem:[%s0 + $0x50] sm:$0xff]
    %v39 = vld [vmem:[%s0 + $0x58] sm:$0xff]
    %v40 = vld [vmem:[%s0 + $0x60] sm:$0xff]
    %v41 = vld [vmem:[%s0 + $0x68] sm:$0xff]
    %v42 = vld [vmem:[%s0 + $0x70] sm:$0xff]
    %v43 = vld [vmem:[%s0 + $0x78] sm:$0xff]
    %v44 = vld [vmem:[%s1] sm:$0xf]
    %v45 = vld [vmem:[%s1 + $0x4] sm:$0xf]
    %v46 = vld [vmem:[%s1 + $0x8] sm:$0xf]
    %v47 = vld [vmem:[%s1 + $0xc] sm:$0xf]
    %v48 = vpack.c.bf16 %v29, %v28
    %v49 = vpack.c.bf16 %v31, %v30
    %v50 = vpack.c.bf16 %v33, %v32
    %v51 = vpack.c.bf16 %v35, %v34
    %v52 = vpack.c.bf16 %v37, %v36
    %v53 = vpack.c.bf16 %v39, %v38
    %v54 = vpack.c.bf16 %v41, %v40
    %v55 = vpack.c.bf16 %v43, %v42
    %v56 = vld [vmem:[%s2] sm:$0x1]
    %v58 = vperm.slane %v56, 0
    %v64 = vunpack.c.l.b16 %v44
    %v65 = vunpack.c.l.b16 %v45
    %v66 = vunpack.c.l.b16 %v46
    %v67 = vunpack.c.l.b16 %v47
    %v68 = vpack.c.b16 %v65, %v64
    %v69 = vpack.c.b16 %v67, %v66
    %vm72 = vcmask 261120
    %v74 = vsel %vm72, %v48, 0
    %v77 = vsel %vm72, %v49, 0
    %v80 = vsel %vm72, %v50, 0
    %v83 = vsel %vm72, %v51, 0
    %v86 = vsel %vm72, %v52, 0
    %v89 = vsel %vm72, %v53, 0
    %v92 = vsel %vm72, %v54, 0
    %v95 = vsel %vm72, %v55, 0
    %97 = vmatpush.bf16.msra.mxu0 0
    %98 = vmatpush.bf16.msra.mxu0 0
    %99 = vmatpush.bf16.msra.mxu0 0
    %100 = vmatpush.bf16.msra.mxu0 0
    %101 = vmatpush.bf16.msra.mxu0 0
    %102 = vmatpush.bf16.msra.mxu0 0
    %103 = vmatpush.bf16.msra.mxu0 %v69
    %104 = vmatpush.bf16.msra.mxu0 %v68
    %105 = vmatmul.bf16.gmra.mxu0 %v74
    %v106 = vpop.f32.mrf.mxu0
    %v107 = vadd.f32 %v58, %v106
    %v108 = vpop.f32.mrf.mxu0
    %v109 = vadd.f32 %v58, %v108
    %110 = vmatmul.bf16.gmra.mxu0 %v77
    %v111 = vpop.f32.mrf.mxu0
    %v112 = vadd.f32 %v58, %v111
    %v113 = vpop.f32.mrf.mxu0
    %v114 = vadd.f32 %v58, %v113
    %115 = vmatmul.bf16.gmra.mxu0 %v80
    %v116 = vpop.f32.mrf.mxu0
    %v117 = vadd.f32 %v58, %v116
    %v118 = vpop.f32.mrf.mxu0
    %v119 = vadd.f32 %v58, %v118
    %120 = vmatmul.bf16.gmra.mxu0 %v83
    %v121 = vpop.f32.mrf.mxu0
    %v122 = vadd.f32 %v58, %v121
    %v123 = vpop.f32.mrf.mxu0
    %v124 = vadd.f32 %v58, %v123
    %125 = vmatmul.bf16.gmra.mxu0 %v86
    %v126 = vpop.f32.mrf.mxu0
    %v127 = vadd.f32 %v58, %v126
    %v128 = vpop.f32.mrf.mxu0
    %v129 = vadd.f32 %v58, %v128
    %130 = vmatmul.bf16.gmra.mxu0 %v89
    %v131 = vpop.f32.mrf.mxu0
    %v132 = vadd.f32 %v58, %v131
    %v133 = vpop.f32.mrf.mxu0
    %v134 = vadd.f32 %v58, %v133
    %135 = vmatmul.bf16.gmra.mxu0 %v92
    %v136 = vpop.f32.mrf.mxu0
    %v137 = vadd.f32 %v58, %v136
    %v138 = vpop.f32.mrf.mxu0
    %v139 = vadd.f32 %v58, %v138
    %140 = vmatmul.bf16.gmra.mxu0 %v95
    %v141 = vpop.f32.mrf.mxu0
    %v142 = vadd.f32 %v58, %v141
    %v143 = vpop.f32.mrf.mxu0
    %v144 = vadd.f32 %v58, %v143
    %145 = vdwg.mxu0
    %v146 = vmax.f32 %v107, 0.0
    %v147 = vmax.f32 %v109, 0.0
    %v148 = vmax.f32 %v112, 0.0
    %v149 = vmax.f32 %v114, 0.0
    %v150 = vmax.f32 %v117, 0.0
    %v151 = vmax.f32 %v119, 0.0
    %v152 = vmax.f32 %v122, 0.0
    %v153 = vmax.f32 %v124, 0.0
    %v154 = vmax.f32 %v127, 0.0
    %v155 = vmax.f32 %v129, 0.0
    %v156 = vmax.f32 %v132, 0.0
    %v157 = vmax.f32 %v134, 0.0
    %v158 = vmax.f32 %v137, 0.0
    %v159 = vmax.f32 %v139, 0.0
    %v160 = vmax.f32 %v142, 0.0
    %v161 = vmax.f32 %v144, 0.0
    %v162 = vld [vmem:[%s3] sm:$0xf]
    %v163 = vld [vmem:[%s3 + $0x4] sm:$0xf]
    %v164 = vld [vmem:[%s3 + $0x8] sm:$0xf]
    %v165 = vld [vmem:[%s3 + $0xc] sm:$0xf]
    %v166 = vpack.c.bf16 %v147, %v146
    %v167 = vpack.c.bf16 %v149, %v148
    %v168 = vpack.c.bf16 %v151, %v150
    %v169 = vpack.c.bf16 %v153, %v152
    %v170 = vpack.c.bf16 %v155, %v154
    %v171 = vpack.c.bf16 %v157, %v156
    %v172 = vpack.c.bf16 %v159, %v158
    %v173 = vpack.c.bf16 %v161, %v160
    %v174 = vld [vmem:[%s4] sm:$0x1]
    %v176 = vperm.slane %v174, 0
    %v182 = vunpack.c.l.b16 %v162
    %v183 = vunpack.c.l.b16 %v163
    %v184 = vunpack.c.l.b16 %v164
    %v185 = vunpack.c.l.b16 %v165
    %v186 = vpack.c.b16 %v183, %v182
    %v187 = vpack.c.b16 %v185, %v184
    %v191 = vsel %vm72, %v166, 0
    %v194 = vsel %vm72, %v167, 0
    %v197 = vsel %vm72, %v168, 0
    %v200 = vsel %vm72, %v169, 0
    %v203 = vsel %vm72, %v170, 0
    %v206 = vsel %vm72, %v171, 0
    %v209 = vsel %vm72, %v172, 0
    %v212 = vsel %vm72, %v173, 0
    %214 = vmatpush.bf16.msra.mxu0 0
    %215 = vmatpush.bf16.msra.mxu0 0
    %216 = vmatpush.bf16.msra.mxu0 0
    %217 = vmatpush.bf16.msra.mxu0 0
    %218 = vmatpush.bf16.msra.mxu0 0
    %219 = vmatpush.bf16.msra.mxu0 0
    %220 = vmatpush.bf16.msra.mxu0 %v187
    %221 = vmatpush.bf16.msra.mxu0 %v186
    %222 = vmatmul.bf16.gmra.mxu0 %v191
    %v223 = vpop.f32.mrf.mxu0
    %v224 = vadd.f32 %v176, %v223
    %v225 = vpop.f32.mrf.mxu0
    %v226 = vadd.f32 %v176, %v225
    %227 = vmatmul.bf16.gmra.mxu0 %v194
    %v228 = vpop.f32.mrf.mxu0
    %v229 = vadd.f32 %v176, %v228
    %v230 = vpop.f32.mrf.mxu0
    %v231 = vadd.f32 %v176, %v230
    %232 = vmatmul.bf16.gmra.mxu0 %v197
    %v233 = vpop.f32.mrf.mxu0
    %v234 = vadd.f32 %v176, %v233
    %v235 = vpop.f32.mrf.mxu0
    %v236 = vadd.f32 %v176, %v235
    %237 = vmatmul.bf16.gmra.mxu0 %v200
    %v238 = vpop.f32.mrf.mxu0
    %v239 = vadd.f32 %v176, %v238
    %v240 = vpop.f32.mrf.mxu0
    %v241 = vadd.f32 %v176, %v240
    %242 = vmatmul.bf16.gmra.mxu0 %v203
    %v243 = vpop.f32.mrf.mxu0
    %v244 = vadd.f32 %v176, %v243
    %v245 = vpop.f32.mrf.mxu0
    %v246 = vadd.f32 %v176, %v245
    %247 = vmatmul.bf16.gmra.mxu0 %v206
    %v248 = vpop.f32.mrf.mxu0
    %v249 = vadd.f32 %v176, %v248
    %v250 = vpop.f32.mrf.mxu0
    %v251 = vadd.f32 %v176, %v250
    %252 = vmatmul.bf16.gmra.mxu0 %v209
    %v253 = vpop.f32.mrf.mxu0
    %v254 = vadd.f32 %v176, %v253
    %v255 = vpop.f32.mrf.mxu0
    %v256 = vadd.f32 %v176, %v255
    %257 = vmatmul.bf16.gmra.mxu0 %v212
    %v258 = vpop.f32.mrf.mxu0
    %v259 = vadd.f32 %v176, %v258
    %v260 = vpop.f32.mrf.mxu0
    %v261 = vadd.f32 %v176, %v260
    %262 = vdwg.mxu0
    %v263 = vmax.f32 %v224, 0.0
    %v264 = vmax.f32 %v226, 0.0
    %v265 = vmax.f32 %v229, 0.0
    %v266 = vmax.f32 %v231, 0.0
    %v267 = vmax.f32 %v234, 0.0
    %v268 = vmax.f32 %v236, 0.0
    %v269 = vmax.f32 %v239, 0.0
    %v270 = vmax.f32 %v241, 0.0
    %v271 = vmax.f32 %v244, 0.0
    %v272 = vmax.f32 %v246, 0.0
    %v273 = vmax.f32 %v249, 0.0
    %v274 = vmax.f32 %v251, 0.0
    %v275 = vmax.f32 %v254, 0.0
    %v276 = vmax.f32 %v256, 0.0
    %v277 = vmax.f32 %v259, 0.0
    %v278 = vmax.f32 %v261, 0.0
    %v279 = vld [vmem:[%s5] sm:$0xf]
    %v280 = vld [vmem:[%s5 + $0x4] sm:$0xf]
    %v281 = vld [vmem:[%s5 + $0x8] sm:$0xf]
    %v282 = vld [vmem:[%s5 + $0xc] sm:$0xf]
    %v283 = vpack.c.bf16 %v264, %v263
    %v284 = vpack.c.bf16 %v266, %v265
    %v285 = vpack.c.bf16 %v268, %v267
    %v286 = vpack.c.bf16 %v270, %v269
    %v287 = vpack.c.bf16 %v272, %v271
    %v288 = vpack.c.bf16 %v274, %v273
    %v289 = vpack.c.bf16 %v276, %v275
    %v290 = vpack.c.bf16 %v278, %v277
    %v291 = vld [vmem:[%s6] sm:$0x1]
    %v293 = vperm.slane %v291, 0
    %v299 = vunpack.c.l.b16 %v279
    %v300 = vunpack.c.l.b16 %v280
    %v301 = vunpack.c.l.b16 %v281
    %v302 = vunpack.c.l.b16 %v282
    %v303 = vpack.c.b16 %v300, %v299
    %v304 = vpack.c.b16 %v302, %v301
    %v308 = vsel %vm72, %v283, 0
    %v311 = vsel %vm72, %v284, 0
    %v314 = vsel %vm72, %v285, 0
    %v317 = vsel %vm72, %v286, 0
    %v320 = vsel %vm72, %v287, 0
    %v323 = vsel %vm72, %v288, 0
    %v326 = vsel %vm72, %v289, 0
    %v329 = vsel %vm72, %v290, 0
    %331 = vmatpush.bf16.msra.mxu0 0
    %332 = vmatpush.bf16.msra.mxu0 0
    %333 = vmatpush.bf16.msra.mxu0 0
    %334 = vmatpush.bf16.msra.mxu0 0
    %335 = vmatpush.bf16.msra.mxu0 0
    %336 = vmatpush.bf16.msra.mxu0 0
    %337 = vmatpush.bf16.msra.mxu0 %v304
    %338 = vmatpush.bf16.msra.mxu0 %v303
    %339 = vmatmul.bf16.gmra.mxu0 %v308
    %v340 = vpop.f32.mrf.mxu0
    %v341 = vadd.f32 %v293, %v340
    %v342 = vpop.f32.mrf.mxu0
    %v343 = vadd.f32 %v293, %v342
    %344 = vmatmul.bf16.gmra.mxu0 %v311
    %v345 = vpop.f32.mrf.mxu0
    %v346 = vadd.f32 %v293, %v345
    %v347 = vpop.f32.mrf.mxu0
    %v348 = vadd.f32 %v293, %v347
    %349 = vmatmul.bf16.gmra.mxu0 %v314
    %v350 = vpop.f32.mrf.mxu0
    %v351 = vadd.f32 %v293, %v350
    %v352 = vpop.f32.mrf.mxu0
    %v353 = vadd.f32 %v293, %v352
    %354 = vmatmul.bf16.gmra.mxu0 %v317
    %v355 = vpop.f32.mrf.mxu0
    %v356 = vadd.f32 %v293, %v355
    %v357 = vpop.f32.mrf.mxu0
    %v358 = vadd.f32 %v293, %v357
    %359 = vmatmul.bf16.gmra.mxu0 %v320
    %v360 = vpop.f32.mrf.mxu0
    %v361 = vadd.f32 %v293, %v360
    %v362 = vpop.f32.mrf.mxu0
    %v363 = vadd.f32 %v293, %v362
    %364 = vmatmul.bf16.gmra.mxu0 %v323
    %v365 = vpop.f32.mrf.mxu0
    %v366 = vadd.f32 %v293, %v365
    %v367 = vpop.f32.mrf.mxu0
    %v368 = vadd.f32 %v293, %v367
    %369 = vmatmul.bf16.gmra.mxu0 %v326
    %v370 = vpop.f32.mrf.mxu0
    %v371 = vadd.f32 %v293, %v370
    %v372 = vpop.f32.mrf.mxu0
    %v373 = vadd.f32 %v293, %v372
    %374 = vmatmul.bf16.gmra.mxu0 %v329
    %v375 = vpop.f32.mrf.mxu0
    %v376 = vadd.f32 %v293, %v375
    %v377 = vpop.f32.mrf.mxu0
    %v378 = vadd.f32 %v293, %v377
    %379 = vdwg.mxu0
    %380 = vxpose.xlu0.b32.start [1/16] %v341, 128
    %381 = vxpose.xlu0.b32.cont [2/16] %v343, 128
    %382 = vxpose.xlu0.b32.cont [3/16] %v346, 128
    %383 = vxpose.xlu0.b32.cont [4/16] %v348, 128
    %384 = vxpose.xlu0.b32.cont [5/16] %v351, 128
    %385 = vxpose.xlu0.b32.cont [6/16] %v353, 128
    %386 = vxpose.xlu0.b32.cont [7/16] %v356, 128
    %387 = vxpose.xlu0.b32.cont [8/16] %v358, 128
    %388 = vxpose.xlu0.b32.cont [9/16] %v361, 128
    %389 = vxpose.xlu0.b32.cont [10/16] %v363, 128
    %390 = vxpose.xlu0.b32.cont [11/16] %v366, 128
    %391 = vxpose.xlu0.b32.cont [12/16] %v368, 128
    %392 = vxpose.xlu0.b32.cont [13/16] %v371, 128
    %393 = vxpose.xlu0.b32.cont [14/16] %v373, 128
    %394 = vxpose.xlu0.b32.cont [15/16] %v376, 128
    %395 = vxpose.xlu0.b32.end [16/16] %v378, 128
    %v396 = vpop.trf.xlu0
    %v397 = vpop.trf.xlu0
    %v398 = vpop.trf.xlu0
    %v399 = vpop.trf.xlu0
    %v400 = vpop.trf.xlu0
    %v401 = vpop.trf.xlu0
    %v402 = vpop.trf.xlu0
    %v403 = vpop.trf.xlu0
    %v404 = vpop.trf.xlu0
    %v405 = vpop.trf.xlu0
    %v406 = vpop.trf.xlu0
    %v407 = vpop.trf.xlu0
    %v408 = vpop.trf.xlu0
    %v409 = vpop.trf.xlu0
    %v410 = vpop.trf.xlu0
    %v411 = vpop.trf.xlu0
    %v412 = vlaneseq
    %v413 = vshrl.u32 %v412, 7
    %v414 = vrot.slane %v396, 4
    %v415 = vmax.f32 %v396, %v414
    %v416 = vrot.slane %v415, 2
    %v417 = vmax.f32 %v415, %v416
    %v418 = vrot.slane %v417, 1
    %v419 = vmax.f32 %v417, %v418
    %vm420 = vcmp.eq.f32.partialorder %v396, %v419
    %v421 = vsel %vm420, %v413, 8
    %v422 = vrot.slane %v421, 4
    %vm423 = vcmp.lt.s32.totalorder %v421, %v422
    %v424 = vsel %vm423, %v421, %v422
    %v425 = vrot.slane %v424, 2
    %vm426 = vcmp.lt.s32.totalorder %v424, %v425
    %v427 = vsel %vm426, %v424, %v425
    %v428 = vrot.slane %v427, 1
    %vm429 = vcmp.lt.s32.totalorder %v427, %v428
    %v430 = vsel %vm429, %v427, %v428
    %vm431 = vcmp.ge.s32.totalorder %v430, 8
    %v432 = vsel %vm431, 0, %v430
    %433 = vst [vmem:[#allocation2] sm:$0x1] %v432
    // Predicated region
    $region30: #{tpu_custom_call.1} parent=1 // pred_check
      _
    $region31: #{tpu_custom_call.1} parent=1 // pred_check_branch
      %435 = sbr.rel (0) target = $region33
    $region32: #{tpu_custom_call.1} parent=1 // pred_region
      %437 = vsyncadd [#allocation3], 0
      %s439 = sshll.u32 [#allocation2], 4
      %s440 = int_to_ptr.vmem [resolvable:$true] %s439
      %s441 = sshll.u32 %s7, 4
      %s442 = int_to_ptr.hbm [resolvable:$true] %s441
      %444 = dma.vmem_to_hbm [thread:$0]  %s440, 16, %s442, [#allocation3]
    $region33: #{tpu_custom_call.1} parent=1 // pred_fallthru
      _
    // Predicated region
    $region34: #{tpu_custom_call.1} parent=1 // pred_check
      _
    $region35: #{tpu_custom_call.1} parent=1 // pred_check_branch
      %446 = sbr.rel (0) target = $region37
    $region36: #{tpu_custom_call.1} parent=1 // pred_region
      %448 = dma.done [#allocation3], 16
    $region37: #{tpu_custom_call.1} parent=1 // pred_fallthru
      _
    %449 = vsyncpa [#allocation3], 1

// kernel: tpu_custom_call.1
$region0: #{tpu_custom_call.1}
  #allocation0 [shape = 'u32[]', space=smem, size = 0x4, offset = 0x4, fixed_abs, tag = 'smem constant byte address 0x4 - core index']
  #allocation1 [shape = 'u32[72,128]{1,0:T(1,128)}', space=vmem, size = 0x9000, scoped, tag = 'internal scratch']
  %s0 = inlined_call_operand.vmem [shape: f32[128,32], index: 0, kind: input, shape index: {}]
  %s1 = inlined_call_operand.vmem [shape: bf16[32,32], index: 1, kind: input, shape index: {}]
  %s2 = inlined_call_operand.vmem [shape: f32[1,32], index: 2, kind: input, shape index: {}]
  %s3 = inlined_call_operand.vmem [shape: bf16[32,32], index: 3, kind: input, shape index: {}]
  %s4 = inlined_call_operand.vmem [shape: f32[1,32], index: 4, kind: input, shape index: {}]
  %s5 = inlined_call_operand.vmem [shape: bf16[32,8], index: 5, kind: input, shape index: {}]
  %s6 = inlined_call_operand.vmem [shape: f32[1,8], index: 6, kind: input, shape index: {}]
  %s7 = inlined_call_operand.hbm [shape: s32[1,1,128], index: 7, kind: output, shape index: {}]
  %s8 = sld [smem:[#allocation0]]
  $region38: #{tpu_custom_call.1} parent=0
    _
  %s10 = ssub.s32 1, %s8
  %s11 = scalar_select 0, %s10, %s8
  $region1: #{tpu_custom_call.1} parent=0
    #allocation2 [shape = 'u8[512]{0}', space=vmem, size = 0x400, scoped, tag = 'output window, operand 0, single buffered']
    #allocation3 [shape = 's32[1]{0}', space=sflag, size = 0x4, scoped, tag = 'scoped memory for tpu_custom_call.1']
    %12 = vsyncpa [#allocation3], 0
    // Predicated region
    $region2: #{tpu_custom_call.1} parent=1 // pred_check
      _
    $region3: #{tpu_custom_call.1} parent=1 // pred_check_branch
      %14 = sbr.rel (0) target = $region5
    $region4: #{tpu_custom_call.1} parent=1 // pred_region
      _
    $region5: #{tpu_custom_call.1} parent=1 // pred_fallthru
      _
    // Predicated region
    $region6: #{tpu_custom_call.1} parent=1 // pred_check
      _
    $region7: #{tpu_custom_call.1} parent=1 // pred_check_branch
      %16 = sbr.rel (0) target = $region9
    $region8: #{tpu_custom_call.1} parent=1 // pred_region
      _
    $region9: #{tpu_custom_call.1} parent=1 // pred_fallthru
      _
    // Predicated region
    $region10: #{tpu_custom_call.1} parent=1 // pred_check
      _
    $region11: #{tpu_custom_call.1} parent=1 // pred_check_branch
      %18 = sbr.rel (0) target = $region13
    $region12: #{tpu_custom_call.1} parent=1 // pred_region
      _
    $region13: #{tpu_custom_call.1} parent=1 // pred_fallthru
      _
    // Predicated region
    $region14: #{tpu_custom_call.1} parent=1 // pred_check
      _
    $region15: #{tpu_custom_call.1} parent=1 // pred_check_branch
      %20 = sbr.rel (0) target = $region17
    $region16: #{tpu_custom_call.1} parent=1 // pred_region
      _
    $region17: #{tpu_custom_call.1} parent=1 // pred_fallthru
      _
    // Predicated region
    $region18: #{tpu_custom_call.1} parent=1 // pred_check
      _
    $region19: #{tpu_custom_call.1} parent=1 // pred_check_branch
      %22 = sbr.rel (0) target = $region21
    $region20: #{tpu_custom_call.1} parent=1 // pred_region
      _
    $region21: #{tpu_custom_call.1} parent=1 // pred_fallthru
      _
    // Predicated region
    $region22: #{tpu_custom_call.1} parent=1 // pred_check
      _
    $region23: #{tpu_custom_call.1} parent=1 // pred_check_branch
      %24 = sbr.rel (0) target = $region25
    $region24: #{tpu_custom_call.1} parent=1 // pred_region
      _
    $region25: #{tpu_custom_call.1} parent=1 // pred_fallthru
      _
    // Predicated region
    $region26: #{tpu_custom_call.1} parent=1 // pred_check
      _
    $region27: #{tpu_custom_call.1} parent=1 // pred_check_branch
      %26 = sbr.rel (0) target = $region29
    $region28: #{tpu_custom_call.1} parent=1 // pred_region
      _
    $region29: #{tpu_custom_call.1} parent=1 // pred_fallthru
      _
    %v28 = vld [vmem:[%s0] sm:$0xff]
    %v29 = vld [vmem:[%s0 + $0x8] sm:$0xff]
    %v30 = vld [vmem:[%s0 + $0x10] sm:$0xff]
    %v31 = vld [vmem:[%s0 + $0x18] sm:$0xff]
    %v32 = vld [vmem:[%s0 + $0x20] sm:$0xff]
    %v33 = vld [vmem:[%s0 + $0x28] sm:$0xff]
    %v34 = vld [vmem:[%s0 + $0x30] sm:$0xff]
    %v35 = vld [vmem:[%s0 + $0x38] sm:$0xff]
    %v36 = vld [vmem:[%s0 + $0x40] sm:$0xff]
    %v37 = vld [vmem:[%s0 + $0x48] sm:$0xff]
    %v38 = vld [vmem:[%s0 + $0x50] sm:$0xff]
    %v39 = vld [vmem:[%s0 + $0x58] sm:$0xff]
    %v40 = vld [vmem:[%s0 + $0x60] sm:$0xff]
    %v41 = vld [vmem:[%s0 + $0x68] sm:$0xff]
    %v42 = vld [vmem:[%s0 + $0x70] sm:$0xff]
    %v43 = vld [vmem:[%s0 + $0x78] sm:$0xff]
    %v44 = vld [vmem:[%s1] sm:$0xf]
    %v45 = vld [vmem:[%s1 + $0x4] sm:$0xf]
    %v46 = vld [vmem:[%s1 + $0x8] sm:$0xf]
    %v47 = vld [vmem:[%s1 + $0xc] sm:$0xf]
    %v48 = vpack.c.bf16 %v29, %v28
    %v49 = vpack.c.bf16 %v31, %v30
    %v50 = vpack.c.bf16 %v33, %v32
    %v51 = vpack.c.bf16 %v35, %v34
    %v52 = vpack.c.bf16 %v37, %v36
    %v53 = vpack.c.bf16 %v39, %v38
    %v54 = vpack.c.bf16 %v41, %v40
    %v55 = vpack.c.bf16 %v43, %v42
    %v56 = vld [vmem:[%s2] sm:$0x1]
    %v58 = vperm.slane %v56, 0
    %v64 = vunpack.c.l.b16 %v44
    %v65 = vunpack.c.l.b16 %v45
    %v66 = vunpack.c.l.b16 %v46
    %v67 = vunpack.c.l.b16 %v47
    %v68 = vpack.c.b16 %v65, %v64
    %v69 = vpack.c.b16 %v67, %v66
    %vm72 = vcmask 261120
    %v74 = vsel %vm72, %v48, 0
    %v77 = vsel %vm72, %v49, 0
    %v80 = vsel %vm72, %v50, 0
    %v83 = vsel %vm72, %v51, 0
    %v86 = vsel %vm72, %v52, 0
    %v89 = vsel %vm72, %v53, 0
    %v92 = vsel %vm72, %v54, 0
    %v95 = vsel %vm72, %v55, 0
    %97 = vmatpush.bf16.msra.mxu0 0
    %98 = vmatpush.bf16.msra.mxu0 0
    %99 = vmatpush.bf16.msra.mxu0 0
    %100 = vmatpush.bf16.msra.mxu0 0
    %101 = vmatpush.bf16.msra.mxu0 0
    %102 = vmatpush.bf16.msra.mxu0 0
    %103 = vmatpush.bf16.msra.mxu0 %v69
    %104 = vmatpush.bf16.msra.mxu0 %v68
    %105 = vmatmul.bf16.gmra.mxu0 %v74
    %v106 = vpop.f32.mrf.mxu0
    %v107 = vadd.f32 %v58, %v106
    %v108 = vpop.f32.mrf.mxu0
    %v109 = vadd.f32 %v58, %v108
    %110 = vmatmul.bf16.gmra.mxu0 %v77
    %v111 = vpop.f32.mrf.mxu0
    %v112 = vadd.f32 %v58, %v111
    %v113 = vpop.f32.mrf.mxu0
    %v114 = vadd.f32 %v58, %v113
    %115 = vmatmul.bf16.gmra.mxu0 %v80
    %v116 = vpop.f32.mrf.mxu0
    %v117 = vadd.f32 %v58, %v116
    %v118 = vpop.f32.mrf.mxu0
    %v119 = vadd.f32 %v58, %v118
    %120 = vmatmul.bf16.gmra.mxu0 %v83
    %v121 = vpop.f32.mrf.mxu0
    %v122 = vadd.f32 %v58, %v121
    %v123 = vpop.f32.mrf.mxu0
    %v124 = vadd.f32 %v58, %v123
    %125 = vmatmul.bf16.gmra.mxu0 %v86
    %v126 = vpop.f32.mrf.mxu0
    %v127 = vadd.f32 %v58, %v126
    %v128 = vpop.f32.mrf.mxu0
    %v129 = vadd.f32 %v58, %v128
    %130 = vmatmul.bf16.gmra.mxu0 %v89
    %v131 = vpop.f32.mrf.mxu0
    %v132 = vadd.f32 %v58, %v131
    %v133 = vpop.f32.mrf.mxu0
    %v134 = vadd.f32 %v58, %v133
    %135 = vmatmul.bf16.gmra.mxu0 %v92
    %v136 = vpop.f32.mrf.mxu0
    %v137 = vadd.f32 %v58, %v136
    %v138 = vpop.f32.mrf.mxu0
    %v139 = vadd.f32 %v58, %v138
    %140 = vmatmul.bf16.gmra.mxu0 %v95
    %v141 = vpop.f32.mrf.mxu0
    %v142 = vadd.f32 %v58, %v141
    %v143 = vpop.f32.mrf.mxu0
    %v144 = vadd.f32 %v58, %v143
    %145 = vdwg.mxu0
    %v146 = vmax.f32 %v107, 0.0
    %v147 = vmax.f32 %v109, 0.0
    %v148 = vmax.f32 %v112, 0.0
    %v149 = vmax.f32 %v114, 0.0
    %v150 = vmax.f32 %v117, 0.0
    %v151 = vmax.f32 %v119, 0.0
    %v152 = vmax.f32 %v122, 0.0
    %v153 = vmax.f32 %v124, 0.0
    %v154 = vmax.f32 %v127, 0.0
    %v155 = vmax.f32 %v129, 0.0
    %v156 = vmax.f32 %v132, 0.0
    %v157 = vmax.f32 %v134, 0.0
    %v158 = vmax.f32 %v137, 0.0
    %v159 = vmax.f32 %v139, 0.0
    %v160 = vmax.f32 %v142, 0.0
    %v161 = vmax.f32 %v144, 0.0
    %v162 = vld [vmem:[%s3] sm:$0xf]
    %v163 = vld [vmem:[%s3 + $0x4] sm:$0xf]
    %v164 = vld [vmem:[%s3 + $0x8] sm:$0xf]
    %v165 = vld [vmem:[%s3 + $0xc] sm:$0xf]
    %v166 = vpack.c.bf16 %v147, %v146
    %v167 = vpack.c.bf16 %v149, %v148
    %v168 = vpack.c.bf16 %v151, %v150
    %v169 = vpack.c.bf16 %v153, %v152
    %v170 = vpack.c.bf16 %v155, %v154
    %v171 = vpack.c.bf16 %v157, %v156
    %v172 = vpack.c.bf16 %v159, %v158
    %v173 = vpack.c.bf16 %v161, %v160
    %v174 = vld [vmem:[%s4] sm:$0x1]
    %v176 = vperm.slane %v174, 0
    %v182 = vunpack.c.l.b16 %v162
    %v183 = vunpack.c.l.b16 %v163
    %v184 = vunpack.c.l.b16 %v164
    %v185 = vunpack.c.l.b16 %v165
    %v186 = vpack.c.b16 %v183, %v182
    %v187 = vpack.c.b16 %v185, %v184
    %v191 = vsel %vm72, %v166, 0
    %v194 = vsel %vm72, %v167, 0
    %v197 = vsel %vm72, %v168, 0
    %v200 = vsel %vm72, %v169, 0
    %v203 = vsel %vm72, %v170, 0
    %v206 = vsel %vm72, %v171, 0
    %v209 = vsel %vm72, %v172, 0
    %v212 = vsel %vm72, %v173, 0
    %214 = vmatpush.bf16.msra.mxu0 0
    %215 = vmatpush.bf16.msra.mxu0 0
    %216 = vmatpush.bf16.msra.mxu0 0
    %217 = vmatpush.bf16.msra.mxu0 0
    %218 = vmatpush.bf16.msra.mxu0 0
    %219 = vmatpush.bf16.msra.mxu0 0
    %220 = vmatpush.bf16.msra.mxu0 %v187
    %221 = vmatpush.bf16.msra.mxu0 %v186
    %222 = vmatmul.bf16.gmra.mxu0 %v191
    %v223 = vpop.f32.mrf.mxu0
    %v224 = vadd.f32 %v176, %v223
    %v225 = vpop.f32.mrf.mxu0
    %v226 = vadd.f32 %v176, %v225
    %227 = vmatmul.bf16.gmra.mxu0 %v194
    %v228 = vpop.f32.mrf.mxu0
    %v229 = vadd.f32 %v176, %v228
    %v230 = vpop.f32.mrf.mxu0
    %v231 = vadd.f32 %v176, %v230
    %232 = vmatmul.bf16.gmra.mxu0 %v197
    %v233 = vpop.f32.mrf.mxu0
    %v234 = vadd.f32 %v176, %v233
    %v235 = vpop.f32.mrf.mxu0
    %v236 = vadd.f32 %v176, %v235
    %237 = vmatmul.bf16.gmra.mxu0 %v200
    %v238 = vpop.f32.mrf.mxu0
    %v239 = vadd.f32 %v176, %v238
    %v240 = vpop.f32.mrf.mxu0
    %v241 = vadd.f32 %v176, %v240
    %242 = vmatmul.bf16.gmra.mxu0 %v203
    %v243 = vpop.f32.mrf.mxu0
    %v244 = vadd.f32 %v176, %v243
    %v245 = vpop.f32.mrf.mxu0
    %v246 = vadd.f32 %v176, %v245
    %247 = vmatmul.bf16.gmra.mxu0 %v206
    %v248 = vpop.f32.mrf.mxu0
    %v249 = vadd.f32 %v176, %v248
    %v250 = vpop.f32.mrf.mxu0
    %v251 = vadd.f32 %v176, %v250
    %252 = vmatmul.bf16.gmra.mxu0 %v209
    %v253 = vpop.f32.mrf.mxu0
    %v254 = vadd.f32 %v176, %v253
    %v255 = vpop.f32.mrf.mxu0
    %v256 = vadd.f32 %v176, %v255
    %257 = vmatmul.bf16.gmra.mxu0 %v212
    %v258 = vpop.f32.mrf.mxu0
    %v259 = vadd.f32 %v176, %v258
    %v260 = vpop.f32.mrf.mxu0
    %v261 = vadd.f32 %v176, %v260
    %262 = vdwg.mxu0
    %v263 = vmax.f32 %v224, 0.0
    %v264 = vmax.f32 %v226, 0.0
    %v265 = vmax.f32 %v229, 0.0
    %v266 = vmax.f32 %v231, 0.0
    %v267 = vmax.f32 %v234, 0.0
    %v268 = vmax.f32 %v236, 0.0
    %v269 = vmax.f32 %v239, 0.0
    %v270 = vmax.f32 %v241, 0.0
    %v271 = vmax.f32 %v244, 0.0
    %v272 = vmax.f32 %v246, 0.0
    %v273 = vmax.f32 %v249, 0.0
    %v274 = vmax.f32 %v251, 0.0
    %v275 = vmax.f32 %v254, 0.0
    %v276 = vmax.f32 %v256, 0.0
    %v277 = vmax.f32 %v259, 0.0
    %v278 = vmax.f32 %v261, 0.0
    %v279 = vld [vmem:[%s5] sm:$0xf]
    %v280 = vld [vmem:[%s5 + $0x4] sm:$0xf]
    %v281 = vld [vmem:[%s5 + $0x8] sm:$0xf]
    %v282 = vld [vmem:[%s5 + $0xc] sm:$0xf]
    %v283 = vpack.c.bf16 %v264, %v263
    %v284 = vpack.c.bf16 %v266, %v265
    %v285 = vpack.c.bf16 %v268, %v267
    %v286 = vpack.c.bf16 %v270, %v269
    %v287 = vpack.c.bf16 %v272, %v271
    %v288 = vpack.c.bf16 %v274, %v273
    %v289 = vpack.c.bf16 %v276, %v275
    %v290 = vpack.c.bf16 %v278, %v277
    %v291 = vld [vmem:[%s6] sm:$0x1]
    %v293 = vperm.slane %v291, 0
    %v299 = vunpack.c.l.b16 %v279
    %v300 = vunpack.c.l.b16 %v280
    %v301 = vunpack.c.l.b16 %v281
    %v302 = vunpack.c.l.b16 %v282
    %v303 = vpack.c.b16 %v300, %v299
    %v304 = vpack.c.b16 %v302, %v301
    %v308 = vsel %vm72, %v283, 0
    %v311 = vsel %vm72, %v284, 0
    %v314 = vsel %vm72, %v285, 0
    %v317 = vsel %vm72, %v286, 0
    %v320 = vsel %vm72, %v287, 0
    %v323 = vsel %vm72, %v288, 0
    %v326 = vsel %vm72, %v289, 0
    %v329 = vsel %vm72, %v290, 0
    %331 = vmatpush.bf16.msra.mxu0 0
    %332 = vmatpush.bf16.msra.mxu0 0
    %333 = vmatpush.bf16.msra.mxu0 0
    %334 = vmatpush.bf16.msra.mxu0 0
    %335 = vmatpush.bf16.msra.mxu0 0
    %336 = vmatpush.bf16.msra.mxu0 0
    %337 = vmatpush.bf16.msra.mxu0 %v304
    %338 = vmatpush.bf16.msra.mxu0 %v303
    %339 = vmatmul.bf16.gmra.mxu0 %v308
    %v340 = vpop.f32.mrf.mxu0
    %v341 = vadd.f32 %v293, %v340
    %v342 = vpop.f32.mrf.mxu0
    %v343 = vadd.f32 %v293, %v342
    %344 = vmatmul.bf16.gmra.mxu0 %v311
    %v345 = vpop.f32.mrf.mxu0
    %v346 = vadd.f32 %v293, %v345
    %v347 = vpop.f32.mrf.mxu0
    %v348 = vadd.f32 %v293, %v347
    %349 = vmatmul.bf16.gmra.mxu0 %v314
    %v350 = vpop.f32.mrf.mxu0
    %v351 = vadd.f32 %v293, %v350
    %v352 = vpop.f32.mrf.mxu0
    %v353 = vadd.f32 %v293, %v352
    %354 = vmatmul.bf16.gmra.mxu0 %v317
    %v355 = vpop.f32.mrf.mxu0
    %v356 = vadd.f32 %v293, %v355
    %v357 = vpop.f32.mrf.mxu0
    %v358 = vadd.f32 %v293, %v357
    %359 = vmatmul.bf16.gmra.mxu0 %v320
    %v360 = vpop.f32.mrf.mxu0
    %v361 = vadd.f32 %v293, %v360
    %v362 = vpop.f32.mrf.mxu0
    %v363 = vadd.f32 %v293, %v362
    %364 = vmatmul.bf16.gmra.mxu0 %v323
    %v365 = vpop.f32.mrf.mxu0
    %v366 = vadd.f32 %v293, %v365
    %v367 = vpop.f32.mrf.mxu0
    %v368 = vadd.f32 %v293, %v367
    %369 = vmatmul.bf16.gmra.mxu0 %v326
    %v370 = vpop.f32.mrf.mxu0
    %v371 = vadd.f32 %v293, %v370
    %v372 = vpop.f32.mrf.mxu0
    %v373 = vadd.f32 %v293, %v372
    %374 = vmatmul.bf16.gmra.mxu0 %v329
    %v375 = vpop.f32.mrf.mxu0
    %v376 = vadd.f32 %v293, %v375
    %v377 = vpop.f32.mrf.mxu0
    %v378 = vadd.f32 %v293, %v377
    %379 = vdwg.mxu0
    %380 = vxpose.xlu0.b32.start [1/16] %v341, 128
    %381 = vxpose.xlu0.b32.cont [2/16] %v343, 128
    %382 = vxpose.xlu0.b32.cont [3/16] %v346, 128
    %383 = vxpose.xlu0.b32.cont [4/16] %v348, 128
    %384 = vxpose.xlu0.b32.cont [5/16] %v351, 128
    %385 = vxpose.xlu0.b32.cont [6/16] %v353, 128
    %386 = vxpose.xlu0.b32.cont [7/16] %v356, 128
    %387 = vxpose.xlu0.b32.cont [8/16] %v358, 128
    %388 = vxpose.xlu0.b32.cont [9/16] %v361, 128
    %389 = vxpose.xlu0.b32.cont [10/16] %v363, 128
    %390 = vxpose.xlu0.b32.cont [11/16] %v366, 128
    %391 = vxpose.xlu0.b32.cont [12/16] %v368, 128
    %392 = vxpose.xlu0.b32.cont [13/16] %v371, 128
    %393 = vxpose.xlu0.b32.cont [14/16] %v373, 128
    %394 = vxpose.xlu0.b32.cont [15/16] %v376, 128
    %395 = vxpose.xlu0.b32.end [16/16] %v378, 128
    %v396 = vpop.trf.xlu0
    %v397 = vpop.trf.xlu0
    %v398 = vpop.trf.xlu0
    %v399 = vpop.trf.xlu0
    %v400 = vpop.trf.xlu0
    %v401 = vpop.trf.xlu0
    %v402 = vpop.trf.xlu0
    %v403 = vpop.trf.xlu0
    %v404 = vpop.trf.xlu0
    %v405 = vpop.trf.xlu0
    %v406 = vpop.trf.xlu0
    %v407 = vpop.trf.xlu0
    %v408 = vpop.trf.xlu0
    %v409 = vpop.trf.xlu0
    %v410 = vpop.trf.xlu0
    %v411 = vpop.trf.xlu0
    %v412 = vlaneseq
    %v413 = vshrl.u32 %v412, 7
    %v414 = vrot.slane %v396, 4
    %v415 = vmax.f32 %v396, %v414
    %v416 = vrot.slane %v415, 2
    %v417 = vmax.f32 %v415, %v416
    %v418 = vrot.slane %v417, 1
    %v419 = vmax.f32 %v417, %v418
    %vm420 = vcmp.eq.f32.partialorder %v396, %v419
    %v421 = vsel %vm420, %v413, 8
    %v422 = vrot.slane %v421, 4
    %vm423 = vcmp.lt.s32.totalorder %v421, %v422
    %v424 = vsel %vm423, %v421, %v422
    %v425 = vrot.slane %v424, 2
    %vm426 = vcmp.lt.s32.totalorder %v424, %v425
    %v427 = vsel %vm426, %v424, %v425
    %v428 = vrot.slane %v427, 1
    %vm429 = vcmp.lt.s32.totalorder %v427, %v428
    %v430 = vsel %vm429, %v427, %v428
    %vm431 = vcmp.ge.s32.totalorder %v430, 8
    %v432 = vsel %vm431, 0, %v430
    %433 = vst [vmem:[#allocation2] sm:$0x1] %v432
    // Predicated region
    $region30: #{tpu_custom_call.1} parent=1 // pred_check
      _
    $region31: #{tpu_custom_call.1} parent=1 // pred_check_branch
      %435 = sbr.rel (0) target = $region33
    $region32: #{tpu_custom_call.1} parent=1 // pred_region
      %437 = vsyncadd [#allocation3], 0
      %s439 = sshll.u32 [#allocation2], 4
      %s440 = int_to_ptr.vmem [resolvable:$true] %s439
      %s441 = sshll.u32 %s7, 4
      %s442 = int_to_ptr.hbm [resolvable:$true] %s441
      %444 = dma.vmem_to_hbm [thread:$0]  %s440, 16, %s442, [#allocation3]
    $region33: #{tpu_custom_call.1} parent=1 // pred_fallthru
      _
    // Predicated region
    $region34: #{tpu_custom_call.1} parent=1 // pred_check
      _
    $region35: #{tpu_custom_call.1} parent=1 // pred_check_branch
      %446 = sbr.rel (0) target = $region37
    $region36: #{tpu_custom_call.1} parent=1 // pred_region
      %448 = dma.done [#allocation3], 16
    $region37: #{tpu_custom_call.1} parent=1 // pred_fallthru
      _
    %449 = vsyncpa [#allocation3], 1

</llo_original>
